<compile_context>
chip_gen: v7x
topology: tpu7x:2x2x1
jax: 0.10.0
libtpu: 0.0.40
codegen_flags: <defaults>
</compile_context>

<pallas_src>
import functools

import jax
import jax.numpy as jnp
from jax.experimental import pallas as pl
from jax.experimental.pallas import tpu as pltpu

EPS = 1e-5
EXPANSION = 4  # Bottleneck expansion.


# ------------------------------ small helpers ------------------------------

def _round_up(v, m):
    return (v + m - 1) // m * m


def _pad_rows(a, rows):
    if a.shape[0] == rows:
        return a
    pad = ((0, rows - a.shape[0]),) + ((0, 0),) * (a.ndim - 1)
    return jnp.pad(a, pad)


def _pick_tn(n):
    if n % 256 == 0:
        return 256
    if n % 128 == 0:
        return 128
    return n


def _lane_fold(n):
    """Fold factor so the last dim becomes lane-dense (128) when n < 128."""
    return 128 // n if (n < 128 and 128 % n == 0) else 1


def _chip_budgets():
    """(per-buffer elementwise byte budget, explicit vmem_limit_bytes|None)."""
    budget, vlim = 2 * 1024 * 1024, None            # safe on v7x (64 MiB VMEM)
    try:
        info = pltpu.get_tpu_info()
        vmem = getattr(info, "vmem_capacity_bytes", 0) or 0
        if vmem >= 100 * 1024 * 1024:               # v5e / v6e: 128 MiB VMEM
            budget, vlim = 4 * 1024 * 1024, 64 * 1024 * 1024
    except Exception:
        pass
    return budget, vlim


_ELEM_BUDGET, _VMEM_LIMIT = _chip_budgets()


def _params(*sem):
    return pltpu.CompilerParams(dimension_semantics=tuple(sem),
                                vmem_limit_bytes=_VMEM_LIMIT)


def _pick_tile_rows(rows, row_bytes, budget):
    """Row tile for an elementwise pass: largest pow2 divisor of `rows` whose
    per-buffer footprint stays under `budget`; prefers >= 2 grid blocks (v7x
    megacore) when that keeps tiles >= 256 rows."""
    cap = max(8, budget // max(1, row_bytes))
    if rows <= cap:
        te = rows
    else:
        te, d = 8, 8
        while d <= cap:
            if rows % d == 0:
                te = d
            d *= 2
    if rows // te < 2 and te >= 512 and rows % (te // 2) == 0:
        te //= 2
    return te


# ----------------------------- Pallas kernels ------------------------------

def _conv_mm_stats_kernel(a_ref, b_ref, o_ref, sum_ref, ssq_ref):
    """y = a @ b (bf16 in, f32 acc); stats from f32 y; store y as bf16."""
    y = jnp.dot(a_ref[...], b_ref[...], preferred_element_type=jnp.float32)
    sum_ref[0] = jnp.sum(y, axis=0, keepdims=True)
    ssq_ref[0] = jnp.sum(y * y, axis=0, keepdims=True)
    o_ref[...] = y.astype(o_ref.dtype)


def _matmul_bias_kernel(a_ref, b_ref, bias_ref, o_ref):
    y = jnp.dot(a_ref[...], b_ref[...], preferred_element_type=jnp.float32)
    o_ref[...] = y + bias_ref[...]


def _affine_kernel(y_ref, s_ref, b_ref, o_ref, *, relu):
    out = y_ref[...].astype(jnp.float32) * s_ref[...] + b_ref[...]
    if relu:
        out = jnp.maximum(out, 0.0)
    o_ref[...] = out.astype(o_ref.dtype)


def _bn_add_relu_kernel(y_ref, s_ref, b_ref, r_ref, o_ref):
    out = (y_ref[...].astype(jnp.float32) * s_ref[...] + b_ref[...]
           + r_ref[...].astype(jnp.float32))
    o_ref[...] = jnp.maximum(out, 0.0).astype(o_ref.dtype)


def _bn2_add_relu_kernel(y_ref, s_ref, b_ref, r_ref, rs_ref, rb_ref, o_ref):
    main = y_ref[...].astype(jnp.float32) * s_ref[...] + b_ref[...]
    side = r_ref[...].astype(jnp.float32) * rs_ref[...] + rb_ref[...]
    o_ref[...] = jnp.maximum(main + side, 0.0).astype(o_ref.dtype)


def _max_kernel(*refs):
    o_ref = refs[-1]
    acc = refs[0][...]
    for r in refs[1:-1]:
        acc = jnp.maximum(acc, r[...])
    o_ref[...] = acc


def _gap_kernel(x_ref, o_ref):
    m = jnp.mean(x_ref[0].astype(jnp.float32), axis=0, keepdims=True)
    o_ref[0] = m.astype(o_ref.dtype)


# ------------------------------ kernel wrappers -----------------------------

def conv_matmul_stats(a, wmat):
    """a: [M, K] bf16, wmat: [K, N] bf16 -> (y bf16 [Mp, N], mean, var, Mp)."""
    M, K = a.shape
    _, N = wmat.shape
    tm = 256 if M >= 256 else _round_up(M, 8)
    Mp = _round_up(M, tm)
    a = _pad_rows(a, Mp)                 # zero rows -> zero y rows (stats use true M)
    tn = _pick_tn(N)
    n_i = Mp // tm
    y, psum, pssq = pl.pallas_call(
        _conv_mm_stats_kernel,
        out_shape=(jax.ShapeDtypeStruct((Mp, N), jnp.bfloat16),
                   jax.ShapeDtypeStruct((n_i, 1, N), jnp.float32),
                   jax.ShapeDtypeStruct((n_i, 1, N), jnp.float32)),
        grid=(n_i, N // tn),
        in_specs=[pl.BlockSpec((tm, K), lambda i, j: (i, 0)),
                  pl.BlockSpec((K, tn), lambda i, j: (0, j))],
        out_specs=(pl.BlockSpec((tm, tn), lambda i, j: (i, j)),
                   pl.BlockSpec((1, 1, tn), lambda i, j: (i, 0, j)),
                   pl.BlockSpec((1, 1, tn), lambda i, j: (i, 0, j))),
        compiler_params=_params("parallel", "parallel"),
    )(a, wmat)
    col_sum = jnp.sum(psum, axis=(0, 1))
    col_ssq = jnp.sum(pssq, axis=(0, 1))
    mean = col_sum / M
    var = jnp.maximum(col_ssq / M - mean * mean, 0.0)
    return y, mean, var, Mp


def _bn_scale_bias(gamma, beta, mean, var):
    scale = gamma * jax.lax.rsqrt(var + EPS)
    bias = beta - mean * scale
    n = scale.shape[0]
    return (scale.reshape(1, n).astype(jnp.float32),
            bias.reshape(1, n).astype(jnp.float32))


def affine_act(y, scale, bias, relu):
    """out = [relu](y * scale + bias); y bf16 in, bf16 out, f32 math in-kernel."""
    Mp, N = y.shape
    f = _lane_fold(N)
    if f > 1 and Mp % f == 0:
        y = y.reshape(Mp // f, N * f)                    # free row-major reshape
        scale = jnp.tile(scale, (1, f))
        bias = jnp.tile(bias, (1, f))
    R, Nf = y.shape
    te = _pick_tile_rows(R, Nf * 2, _ELEM_BUDGET)
    row_spec = pl.BlockSpec((te, Nf), lambda i: (i, 0))
    vec_spec = pl.BlockSpec((1, Nf), lambda i: (0, 0))
    out = pl.pallas_call(
        functools.partial(_affine_kernel, relu=relu),
        out_shape=jax.ShapeDtypeStruct((R, Nf), jnp.bfloat16),
        grid=(R // te,),
        in_specs=[row_spec, vec_spec, vec_spec],
        out_specs=row_spec,
        compiler_params=_params("parallel"),
    )(y, scale, bias)
    return out.reshape(Mp, N)


def bn_add_relu(y, scale, bias, res, res_scale=None, res_bias=None):
    """out = relu(y*scale+bias + res)              (res already final, bf16)
       out = relu(y*scale+bias + res*res_scale+res_bias)  (fused downsample BN)."""
    Mp, N = y.shape
    f = _lane_fold(N)
    if f > 1 and Mp % f == 0:
        y = y.reshape(Mp // f, N * f)
        res = res.reshape(Mp // f, N * f)
        scale = jnp.tile(scale, (1, f))
        bias = jnp.tile(bias, (1, f))
        if res_scale is not None:
            res_scale = jnp.tile(res_scale, (1, f))
            res_bias = jnp.tile(res_bias, (1, f))
    R, Nf = y.shape
    te = _pick_tile_rows(R, Nf * 2, _ELEM_BUDGET)
    row_spec = pl.BlockSpec((te, Nf), lambda i: (i, 0))
    vec_spec = pl.BlockSpec((1, Nf), lambda i: (0, 0))
    if res_scale is None:
        out = pl.pallas_call(
            _bn_add_relu_kernel,
            out_shape=jax.ShapeDtypeStruct((R, Nf), jnp.bfloat16),
            grid=(R // te,),
            in_specs=[row_spec, vec_spec, vec_spec, row_spec],
            out_specs=row_spec,
            compiler_params=_params("parallel"),
        )(y, scale, bias, res)
    else:
        out = pl.pallas_call(
            _bn2_add_relu_kernel,
            out_shape=jax.ShapeDtypeStruct((R, Nf), jnp.bfloat16),
            grid=(R // te,),
            in_specs=[row_spec, vec_spec, vec_spec, row_spec, vec_spec, vec_spec],
            out_specs=row_spec,
            compiler_params=_params("parallel"),
        )(y, scale, bias, res, res_scale, res_bias)
    return out.reshape(Mp, N)


def maxpool2d(x, k=3, stride=2, pad=1):
    """Chained bf16 max over k*k shifted (M, C) slabs, lane-folded when C < 128."""
    B, H, W, C = x.shape
    Ho = (H + 2 * pad - k) // stride + 1
    Wo = (W + 2 * pad - k) // stride + 1
    xp = jnp.pad(x, ((0, 0), (pad, pad), (pad, pad), (0, 0)),
                 constant_values=-jnp.inf)
    M = B * Ho * Wo
    # TODO(synk): the 9 shifted slabs are still materialized in HBM; an
    # in-kernel window max over a padded-input strip would read it only once.
    slabs = [xp[:, i:i + stride * Ho:stride, j:j + stride * Wo:stride, :]
             .reshape(M, C) for i in range(k) for j in range(k)]
    Mp = _round_up(M, 8)
    f = _lane_fold(C)
    if Mp % f != 0:
        f = 1
    slabs = [_pad_rows(s, Mp) for s in slabs]
    if f > 1:
        slabs = [s.reshape(Mp // f, C * f) for s in slabs]
    R, Cf = slabs[0].shape
    te = _pick_tile_rows(R, Cf * 2, _ELEM_BUDGET)
    out = pl.pallas_call(
        _max_kernel,
        out_shape=jax.ShapeDtypeStruct((R, Cf), x.dtype),
        grid=(R // te,),
        in_specs=[pl.BlockSpec((te, Cf), lambda i: (i, 0))] * (k * k),
        out_specs=pl.BlockSpec((te, Cf), lambda i: (i, 0)),
        compiler_params=_params("parallel"),
    )(*slabs)
    out = out.reshape(Mp, C)[:M]
    return out.reshape(B, Ho, Wo, C)


def global_avgpool(x):
    B, H, W, C = x.shape
    xr = x.reshape(B, H * W, C)
    out = pl.pallas_call(
        _gap_kernel,
        out_shape=jax.ShapeDtypeStruct((B, 1, C), jnp.bfloat16),
        grid=(B,),
        in_specs=[pl.BlockSpec((1, H * W, C), lambda i: (i, 0, 0))],
        out_specs=pl.BlockSpec((1, 1, C), lambda i: (i, 0, 0)),
        compiler_params=_params("parallel"),
    )(xr)
    return out.reshape(B, C)


def linear(x, wmat, bias):
    """x: [M, K] bf16, wmat: [K, N] bf16, bias: [N] f32; bias fused in epilogue."""
    M, K = x.shape
    N = wmat.shape[1]
    Mp = _round_up(M, 8)
    xp = _pad_rows(x, Mp)
    tn = _pick_tn(N)
    out = pl.pallas_call(
        _matmul_bias_kernel,
        out_shape=jax.ShapeDtypeStruct((Mp, N), jnp.float32),
        grid=(1, N // tn),
        in_specs=[pl.BlockSpec((Mp, K), lambda i, j: (0, 0)),
                  pl.BlockSpec((K, tn), lambda i, j: (0, j)),
                  pl.BlockSpec((1, tn), lambda i, j: (0, j))],
        out_specs=pl.BlockSpec((Mp, tn), lambda i, j: (0, j)),
        compiler_params=_params("parallel", "parallel"),
    )(xp, wmat, bias.reshape(1, N).astype(jnp.float32))
    return out if Mp == M else out[:M]


# ------------------------------ layer assembly ------------------------------

def _im2col(x, kh, kw, stride, pad):
    """x: [B, H, W, C] bf16 -> a: [B*Ho*Wo, kh*kw*C] bf16 (JAX glue).
    TODO(synk): replace with a direct tap-accumulating conv kernel to avoid
    the HBM patch matrix for kh, kw > 1."""
    B, H, W, C = x.shape
    Ho = (H + 2 * pad - kh) // stride + 1
    Wo = (W + 2 * pad - kw) // stride + 1
    if kh == 1 and kw == 1 and pad == 0:
        if stride == 1:
            return x.reshape(B * H * W, C), Ho, Wo
        return x[:, ::stride, ::stride, :].reshape(B * Ho * Wo, C), Ho, Wo
    xp = jnp.pad(x, ((0, 0), (pad, pad), (pad, pad), (0, 0)))
    cols = [xp[:, i:i + stride * Ho:stride, j:j + stride * Wo:stride, :]
            for i in range(kh) for j in range(kw)]
    a = jnp.concatenate(cols, axis=-1)          # [B, Ho, Wo, kh*kw*C]
    return a.reshape(B * Ho * Wo, kh * kw * C), Ho, Wo


def conv_bn_act(x, cp, relu):
    """Conv2d(bias=False) + BatchNorm2d (batch stats) + optional ReLU."""
    B = x.shape[0]
    a, Ho, Wo = _im2col(x, cp["k"], cp["k"], cp["stride"], cp["pad"])
    y, mean, var, Mp = conv_matmul_stats(a, cp["w"])
    scale, bias = _bn_scale_bias(cp["gamma"], cp["beta"], mean, var)
    out = affine_act(y, scale, bias, relu)
    M = B * Ho * Wo
    N = cp["w"].shape[1]
    out = out if Mp == M else out[:M]
    return out.reshape(B, Ho, Wo, N)


def bottleneck_block(x, bp):
    B, H, W, Cin = x.shape
    out = conv_bn_act(x, bp["conv1"], relu=True)
    out = conv_bn_act(out, bp["conv2"], relu=True)

    # conv3: matmul + stats only; its BN affine is fused with the residual add.
    a3, Ho, Wo = _im2col(out, 1, 1, 1, 0)
    y3, mean3, var3, Mp = conv_matmul_stats(a3, bp["conv3"]["w"])
    s3, b3 = _bn_scale_bias(bp["conv3"]["gamma"], bp["conv3"]["beta"], mean3, var3)
    N = bp["conv3"]["w"].shape[1]
    M = B * Ho * Wo

    if "ds" in bp:
        # Downsample: raw 1x1 strided matmul; its BN affine is fused into the
        # residual kernel (no materialized identity tensor).
        cd = bp["ds"]
        ad, _, _ = _im2col(x, 1, 1, cd["stride"], 0)
        yd, md, vd, _ = conv_matmul_stats(ad, cd["w"])
        sd, bd = _bn_scale_bias(cd["gamma"], cd["beta"], md, vd)
        fused = bn_add_relu(y3, s3, b3, yd, sd, bd)
    else:
        identity = _pad_rows(x.reshape(M, Cin), Mp)      # Cin == N here
        fused = bn_add_relu(y3, s3, b3, identity)

    fused = fused if Mp == M else fused[:M]
    return fused.reshape(B, Ho, Wo, N)


def resnet_forward(params, x_nchw):
    x = jnp.transpose(x_nchw, (0, 2, 3, 1)).astype(jnp.bfloat16)  # NCHW -> NHWC
    x = conv_bn_act(x, params["conv1"], relu=True)
    x = maxpool2d(x, k=3, stride=2, pad=1)
    for li in range(1, 5):
        for bp in params[f"layer{li}"]:
            x = bottleneck_block(x, bp)
    feat = global_avgpool(x)                                  # [B, 512*EXPANSION]
    return linear(feat, params["fc_w"], params["fc_b"])


# ----------------------------- parameter init -------------------------------

def _conv_param(key, cin, cout, k, stride, pad, std=0.05):
    w = jax.random.normal(key, (cout, cin, k, k), jnp.float32) * std
    wmat = jnp.transpose(w, (2, 3, 1, 0)).reshape(k * k * cin, cout)
    return {"w": wmat.astype(jnp.bfloat16), "k": k, "stride": stride, "pad": pad,
            "gamma": jnp.ones((cout,), jnp.float32),
            "beta": jnp.zeros((cout,), jnp.float32)}


def init_resnet_params(key, layers=(2, 1, 1, 1), num_classes=10):
    params = {}
    key, k1 = jax.random.split(key)
    params["conv1"] = _conv_param(k1, 3, 64, 7, 2, 3)
    inplanes = 64
    plan = [(64, layers[0], 1), (128, layers[1], 2),
            (256, layers[2], 2), (512, layers[3], 2)]
    for li, (planes, blocks, stride) in enumerate(plan, start=1):
        blist = []
        for b in range(blocks):
            s = stride if b == 0 else 1
            need_ds = (s != 1) or (inplanes != planes * EXPANSION)
            key, ka, kb, kc, kd = jax.random.split(key, 5)
            bp = {
                "conv1": _conv_param(ka, inplanes, planes, 1, 1, 0),
                "conv2": _conv_param(kb, planes, planes, 3, s, 1),
                "conv3": _conv_param(kc, planes, planes * EXPANSION, 1, 1, 0),
            }
            if need_ds:
                bp["ds"] = _conv_param(kd, inplanes, planes * EXPANSION, 1, s, 0)
            blist.append(bp)
            inplanes = planes * EXPANSION
        params[f"layer{li}"] = blist
    key, kf = jax.random.split(key)
    fc_w = jax.random.normal(kf, (num_classes, 512 * EXPANSION), jnp.float32) * 0.02
    params["fc_w"] = jnp.transpose(fc_w).astype(jnp.bfloat16)   # [in, classes]
    params["fc_b"] = jnp.zeros((num_classes,), jnp.float32)
    return params


# ----------------------------------- main -----------------------------------

if __name__ == "__main__":
    key = jax.random.PRNGKey(0)
    kp, kx = jax.random.split(key)
    params = init_resnet_params(kp, layers=(2, 1, 1, 1), num_classes=10)
    # Small input consistent with the module: NCHW, 3 input channels.
    x = jax.random.normal(kx, (2, 3, 32, 32), jnp.float32)
    logits = resnet_forward(params, x)
    logits = jax.block_until_ready(logits)
    assert logits.shape == (2, 10)
    assert bool(jnp.all(jnp.isfinite(logits)))
    print("KERNEL_OK")
</pallas_src>

<mosaic_0001>
module attributes {stable_mosaic.version = 11 : i64} {
  func.func @_conv_mm_stats_kernel(%arg0: i32, %arg1: i32, %arg2: memref<256x147xbf16, #tpu.memory_space<vmem>>, %arg3: memref<147x64xbf16, #tpu.memory_space<vmem>>, %arg4: memref<256x64xbf16, #tpu.memory_space<vmem>>, %arg5: memref<1x1x64xf32, #tpu.memory_space<vmem>>, %arg6: memref<1x1x64xf32, #tpu.memory_space<vmem>>) attributes {dimension_semantics = [#tpu.dimension_semantics<parallel>, #tpu.dimension_semantics<parallel>], iteration_bounds = array<i64: 2, 1>, scalar_prefetch = 0 : i64, scratch_operands = 0 : i64, tpu.core_type = #tpu.core_type<tc>, window_params = [{transform_indices = @transform_0, window_bounds = array<i64: 256, 147>}, {transform_indices = @transform_1, window_bounds = array<i64: 147, 64>}, {transform_indices = @transform_2, window_bounds = array<i64: 256, 64>}, {transform_indices = @transform_3, window_bounds = array<i64: 1, 1, 64>}, {transform_indices = @transform_4, window_bounds = array<i64: 1, 1, 64>}]} {
    %c0 = arith.constant 0 : index
    %c0_0 = arith.constant 0 : index
    %0 = vector.load %arg2[%c0, %c0_0] : memref<256x147xbf16, #tpu.memory_space<vmem>>, vector<256x147xbf16>
    %c0_1 = arith.constant 0 : index
    %c0_2 = arith.constant 0 : index
    %1 = vector.load %arg3[%c0_1, %c0_2] : memref<147x64xbf16, #tpu.memory_space<vmem>>, vector<147x64xbf16>
    %cst = arith.constant dense<0.000000e+00> : vector<256x64xf32>
    %2 = tpu.matmul %0, %1, %cst {dimension_numbers = #tpu.dot_dimension_numbers<[1], [0], [0], [1], [0, 0, 1, 1], [], []>} : vector<256x147xbf16>, vector<147x64xbf16>, vector<256x64xf32> -> vector<256x64xf32>
    %cst_3 = arith.constant dense<0.000000e+00> : vector<64xf32>
    %3 = vector.multi_reduction <add>, %2, %cst_3 [0] : vector<256x64xf32> to vector<64xf32>
    %4 = vector.shape_cast %3 : vector<64xf32> to vector<1x64xf32>
    %c0_4 = arith.constant 0 : index
    %c0_5 = arith.constant 0 : index
    %c0_6 = arith.constant 0 : index
    %5 = vector.load %arg5[%c0_4, %c0_5, %c0_6] : memref<1x1x64xf32, #tpu.memory_space<vmem>>, vector<1x1x64xf32>
    %6 = vector.shape_cast %5 : vector<1x1x64xf32> to vector<1x64xf32>
    %7 = vector.shape_cast %4 : vector<1x64xf32> to vector<1x1x64xf32>
    tpu.vector_store %arg5[%c0_4, %c0_5, %c0_6], %7 {strides = array<i32>} : memref<1x1x64xf32, #tpu.memory_space<vmem>>, vector<1x1x64xf32>,
    %8 = arith.mulf %2, %2 : vector<256x64xf32>
    %cst_7 = arith.constant dense<0.000000e+00> : vector<64xf32>
    %9 = vector.multi_reduction <add>, %8, %cst_7 [0] : vector<256x64xf32> to vector<64xf32>
    %10 = vector.shape_cast %9 : vector<64xf32> to vector<1x64xf32>
    %c0_8 = arith.constant 0 : index
    %c0_9 = arith.constant 0 : index
    %c0_10 = arith.constant 0 : index
    %11 = vector.load %arg6[%c0_8, %c0_9, %c0_10] : memref<1x1x64xf32, #tpu.memory_space<vmem>>, vector<1x1x64xf32>
    %12 = vector.shape_cast %11 : vector<1x1x64xf32> to vector<1x64xf32>
    %13 = vector.shape_cast %10 : vector<1x64xf32> to vector<1x1x64xf32>
    tpu.vector_store %arg6[%c0_8, %c0_9, %c0_10], %13 {strides = array<i32>} : memref<1x1x64xf32, #tpu.memory_space<vmem>>, vector<1x1x64xf32>,
    %14 = arith.truncf %2 : vector<256x64xf32> to vector<256x64xbf16>
    %c0_11 = arith.constant 0 : index
    %c0_12 = arith.constant 0 : index
    %15 = vector.load %arg4[%c0_11, %c0_12] : memref<256x64xbf16, #tpu.memory_space<vmem>>, vector<256x64xbf16>
    tpu.vector_store %arg4[%c0_11, %c0_12], %14 {strides = array<i32>} : memref<256x64xbf16, #tpu.memory_space<vmem>>, vector<256x64xbf16>,
    return
  }
  func.func @transform_0(%arg0: i32, %arg1: i32) -> (i32, i32) {
    %c0_i32 = arith.constant 0 : i32
    %c0_i32_0 = arith.constant 0 : i32
    return %arg0, %c0_i32 : i32, i32
  }
  func.func @transform_1(%arg0: i32, %arg1: i32) -> (i32, i32) {
    %c0_i32 = arith.constant 0 : i32
    %c0_i32_0 = arith.constant 0 : i32
    return %c0_i32, %arg1 : i32, i32
  }
  func.func @transform_2(%arg0: i32, %arg1: i32) -> (i32, i32) {
    %c0_i32 = arith.constant 0 : i32
    return %arg0, %arg1 : i32, i32
  }
  func.func @transform_3(%arg0: i32, %arg1: i32) -> (i32, i32, i32) {
    %c0_i32 = arith.constant 0 : i32
    %c0_i32_0 = arith.constant 0 : i32
    return %arg0, %c0_i32, %arg1 : i32, i32, i32
  }
  func.func @transform_4(%arg0: i32, %arg1: i32) -> (i32, i32, i32) {
    %c0_i32 = arith.constant 0 : i32
    %c0_i32_0 = arith.constant 0 : i32
    return %arg0, %c0_i32, %arg1 : i32, i32, i32
  }
}

</mosaic_0001>

<llo_original>
// kernel: tpu_custom_call.1
$region0: #{tpu_custom_call.1}
  #allocation0 [shape = 'u32[]', space=smem, size = 0x4, offset = 0x4, fixed_abs, tag = 'smem constant byte address 0x4 - core index']
  #allocation1 [shape = 'u32[144,128]{1,0:T(1,128)}', space=vmem, size = 0x12000, scoped, tag = 'internal scratch']
  %s0 = inlined_call_operand.vmem [shape: bf16[512,147], index: 0, kind: input, shape index: {}]
  %s1 = inlined_call_operand.vmem [shape: bf16[147,64], index: 1, kind: input, shape index: {}]
  %s2 = inlined_call_operand.vmem [shape: bf16[512,64], index: 2, kind: output, shape index: {0}]
  %s3 = inlined_call_operand.hbm [shape: f32[2,1,64], index: 3, kind: output, shape index: {1}]
  %s4 = inlined_call_operand.hbm [shape: f32[2,1,64], index: 4, kind: output, shape index: {2}]
  %5 = xla_tuple %s2, %s3, %s4
  %s6 = sld [smem:[#allocation0]]
  $region57: #{tpu_custom_call.1} parent=0
    _
  %s8 = ssub.s32 1, %s6
  %s9 = scalar_select 0, %s8, %s6
  $region1: #{tpu_custom_call.1} parent=0
    #allocation2 [shape = 'u8[1024]{0}', space=vmem, size = 0x400, scoped, tag = 'output window, operand 1']
    #allocation3 [shape = 's32[2]{0}', space=sflag, size = 0x8, scoped, tag = 'scoped memory for tpu_custom_call.1']
    #allocation4 [shape = 'u8[1024]{0}', space=vmem, size = 0x400, scoped, tag = 'output window, operand 2']
    #allocation5 [shape = 's32[2]{0}', space=sflag, size = 0x8, scoped, tag = 'scoped memory for tpu_custom_call.1']
    %10 = vsyncpa [#allocation3], 0
    %s11 = scalar_lea.sflag [#allocation3], 1
    %12 = vsyncpa %s11, 0
    %13 = vsyncpa [#allocation5], 0
    %s14 = scalar_lea.sflag [#allocation5], 1
    %15 = vsyncpa %s14, 0
    loop: start=0, step=1, limit=4
    $region2: #{tpu_custom_call.1} parent=1 // loop_pre_header
      _
    $region3: #{tpu_custom_call.1} parent=1 // loop_header
      %s17 = sphi 0, %s21
      %p18 = scmp.ge.s32.totalorder %s17, 4
      %s24 = sphi 0, %s36
      %s25 = sphi 0, %s32
      %s26 = sphi 0, %s24
      %s27 = sphi 0, %s25
      %s28 = sphi 0, %s26
      %s29 = sphi 0, %s27
      %s39 = sphi 0, %s41
      %s42 = sphi 0, %s39
      %s43 = sphi 0, %s42
      %s59 = sphi 0, %s43
      %s65 = sphi 0, %s67
      %s68 = sphi 0, %s65
      %s69 = sphi 0, %s68
      %s85 = sphi 0, %s69
      %s93 = sphi 0, %s95
      %s96 = sphi 0, %s93
      %s97 = sphi 0, %s96
      %s113 = sphi 0, %s97
      %s121 = sphi 0, %s123
      %s124 = sphi 0, %s121
      %s125 = sphi 0, %s124
      %s141 = sphi 0, %s125
      %s149 = sphi 0, %s151
      %s152 = sphi 0, %s149
      %s153 = sphi 0, %s152
      %s169 = sphi 0, %s153
    $region4: #{tpu_custom_call.1} parent=1 // loop_header_branch
      %20 = sbr.rel (%p18) target = $region8
    $region5: #{tpu_custom_call.1} parent=1 // loop_body
      %s22 = ssub.s32 %s17, 1
      %s23 = ssub.s32 %s17, 2
      %s30 = sadd.s32 1, %s25
      %p31 = scmp.ge.s32.totalorder %s30, 1
      %s32 = scalar_select %p31, 0, %s30
      %s33 = sadd.s32 1, %s24
      %s34 = scalar_select %p31, %s33, %s24
      %p35 = scmp.ge.s32.totalorder %s34, 2
      %s36 = scalar_select %p35, 0, %s34
      %s37 = ssub.s32 %s24, %s36
      %p38 = scmp.eq.s32.totalorder %s37, 0
      %s40 = sadd.s32 %s39, 1
      %s41 = scalar_select %p38, %s39, %s40
      %p44 = pneg %p38
      %p45 = scmp.eq.s32.totalorder %s17, 1
      %p46 = por %p44, %p45
      %p47 = scmp.ne.s32.totalorder %s39, %s42
      %p48 = scmp.eq.s32.totalorder %s17, 0
      %p49 = por %p47, %p48
      %p50 = scmp.ne.s32.totalorder %s39, %s42
      %p51 = scmp.eq.s32.totalorder %s22, 1
      %p52 = por %p50, %p51
      %p53 = scmp.ne.s32.totalorder %s42, %s43
      %p54 = scmp.eq.s32.totalorder %s22, 0
      %p55 = por %p53, %p54
      %p56 = scmp.ne.s32.totalorder %s42, %s43
      %p57 = scmp.eq.s32.totalorder %s23, 1
      %p58 = por %p56, %p57
      %p60 = scmp.ne.s32.totalorder %s43, %s59
      %p61 = scmp.eq.s32.totalorder %s23, 0
      %p62 = por %p60, %p61
      %s63 = ssub.s32 %s25, %s32
      %p64 = scmp.eq.s32.totalorder %s63, 0
      %s66 = sadd.s32 %s65, 1
      %s67 = scalar_select %p64, %s65, %s66
      %p70 = pneg %p64
      %p71 = scmp.eq.s32.totalorder %s17, 1
      %p72 = por %p70, %p71
      %p73 = scmp.ne.s32.totalorder %s65, %s68
      %p74 = scmp.eq.s32.totalorder %s17, 0
      %p75 = por %p73, %p74
      %p76 = scmp.ne.s32.totalorder %s65, %s68
      %p77 = scmp.eq.s32.totalorder %s22, 1
      %p78 = por %p76, %p77
      %p79 = scmp.ne.s32.totalorder %s68, %s69
      %p80 = scmp.eq.s32.totalorder %s22, 0
      %p81 = por %p79, %p80
      %p82 = scmp.ne.s32.totalorder %s68, %s69
      %p83 = scmp.eq.s32.totalorder %s23, 1
      %p84 = por %p82, %p83
      %p86 = scmp.ne.s32.totalorder %s69, %s85
      %p87 = scmp.eq.s32.totalorder %s23, 0
      %p88 = por %p86, %p87
      %s89 = ssub.s32 %s24, %s36
      %s90 = ssub.s32 %s25, %s32
      %s91 = sor.u32 %s89, %s90
      %p92 = scmp.eq.s32.totalorder %s91, 0
      %s94 = sadd.s32 %s93, 1
      %s95 = scalar_select %p92, %s93, %s94
      %p98 = pneg %p92
      %p99 = scmp.eq.s32.totalorder %s17, 1
      %p100 = por %p98, %p99
      %p101 = scmp.ne.s32.totalorder %s93, %s96
      %p102 = scmp.eq.s32.totalorder %s17, 0
      %p103 = por %p101, %p102
      %p104 = scmp.ne.s32.totalorder %s93, %s96
      %p105 = scmp.eq.s32.totalorder %s22, 1
      %p106 = por %p104, %p105
      %p107 = scmp.ne.s32.totalorder %s96, %s97
      %p108 = scmp.eq.s32.totalorder %s22, 0
      %p109 = por %p107, %p108
      %p110 = scmp.ne.s32.totalorder %s96, %s97
      %p111 = scmp.eq.s32.totalorder %s23, 1
      %p112 = por %p110, %p111
      %p114 = scmp.ne.s32.totalorder %s97, %s113
      %p115 = scmp.eq.s32.totalorder %s23, 0
      %p116 = por %p114, %p115
      %s117 = ssub.s32 %s24, %s36
      %s118 = ssub.s32 %s25, %s32
      %s119 = sor.u32 %s117, %s118
      %p120 = scmp.eq.s32.totalorder %s119, 0
      %s122 = sadd.s32 %s121, 1
      %s123 = scalar_select %p120, %s121, %s122
      %p126 = pneg %p120
      %p127 = scmp.eq.s32.totalorder %s17, 1
      %p128 = por %p126, %p127
      %p129 = scmp.ne.s32.totalorder %s121, %s124
      %p130 = scmp.eq.s32.totalorder %s17, 0
      %p131 = por %p129, %p130
      %p132 = scmp.ne.s32.totalorder %s121, %s124
      %p133 = scmp.eq.s32.totalorder %s22, 1
      %p134 = por %p132, %p133
      %p135 = scmp.ne.s32.totalorder %s124, %s125
      %p136 = scmp.eq.s32.totalorder %s22, 0
      %p137 = por %p135, %p136
      %p138 = scmp.ne.s32.totalorder %s124, %s125
      %p139 = scmp.eq.s32.totalorder %s23, 1
      %p140 = por %p138, %p139
      %p142 = scmp.ne.s32.totalorder %s125, %s141
      %p143 = scmp.eq.s32.totalorder %s23, 0
      %p144 = por %p142, %p143
      %s145 = ssub.s32 %s24, %s36
      %s146 = ssub.s32 %s25, %s32
      %s147 = sor.u32 %s145, %s146
      %p148 = scmp.eq.s32.totalorder %s147, 0
      %s150 = sadd.s32 %s149, 1
      %s151 = scalar_select %p148, %s149, %s150
      %p154 = pneg %p148
      %p155 = scmp.eq.s32.totalorder %s17, 1
      %p156 = por %p154, %p155
      %p157 = scmp.ne.s32.totalorder %s149, %s152
      %p158 = scmp.eq.s32.totalorder %s17, 0
      %p159 = por %p157, %p158
      %p160 = scmp.ne.s32.totalorder %s149, %s152
      %p161 = scmp.eq.s32.totalorder %s22, 1
      %p162 = por %p160, %p161
      %p163 = scmp.ne.s32.totalorder %s152, %s153
      %p164 = scmp.eq.s32.totalorder %s22, 0
      %p165 = por %p163, %p164
      %p166 = scmp.ne.s32.totalorder %s152, %s153
      %p167 = scmp.eq.s32.totalorder %s23, 1
      %p168 = por %p166, %p167
      %p170 = scmp.ne.s32.totalorder %s153, %s169
      %p171 = scmp.eq.s32.totalorder %s23, 0
      %p172 = por %p170, %p171
      %p173 = scmp.le.s32.totalorder 1, %s17
      %p174 = scmp.lt.s32.totalorder %s17, 3
      %p175 = pnand %p173, %p174
      %p176 = pneg %p175
      // Predicated region
      $region9: #{tpu_custom_call.1} parent=5 // pred_check
        _
      $region10: #{tpu_custom_call.1} parent=5 // pred_check_branch
        %178 = sbr.rel (%p175) target = $region12
      $region11: #{tpu_custom_call.1} parent=5 // pred_region
        %s179 = ssub.s32 %s17, 1
        // Predicated region
        $region13: #{tpu_custom_call.1} parent=11 // pred_check
          %p180 = pneg %p81
        $region14: #{tpu_custom_call.1} parent=11 // pred_check_branch
          %182 = sbr.rel (%p180) target = $region16
        $region15: #{tpu_custom_call.1} parent=11 // pred_region
          %p183 = scmp.lt.s32.totalorder %s27, 0
          %s184 = scalar_select %p183, %s27, 0
          %s185 = smul.addr %s184, 4
          %s186 = scalar_lea.vmem %s1, %s185
        $region16: #{tpu_custom_call.1} parent=11 // pred_fallthru
          _
      $region12: #{tpu_custom_call.1} parent=5 // pred_fallthru
        _
      %p187 = scmp.lt.s32.totalorder %s17, 2
      // Predicated region
      $region17: #{tpu_custom_call.1} parent=5 // pred_check
        %p188 = pneg %p187
      $region18: #{tpu_custom_call.1} parent=5 // pred_check_branch
        %190 = sbr.rel (%p188) target = $region20
      $region19: #{tpu_custom_call.1} parent=5 // pred_region
        // Predicated region
        $region21: #{tpu_custom_call.1} parent=19 // pred_check
          %p191 = pneg %p49
        $region22: #{tpu_custom_call.1} parent=19 // pred_check_branch
          %193 = sbr.rel (%p191) target = $region24
        $region23: #{tpu_custom_call.1} parent=19 // pred_region
          %s194 = smul.u32 32, %s24
          %p195 = scmp.lt.s32.totalorder %s194, 63
          %s196 = scalar_select %p195, %s194, 63
          %s197 = smul.addr %s196, 2
          %s198 = smul.addr %s197, 4
          %s199 = scalar_lea.vmem %s0, %s198
          %s200 = smul.u32 32, %s24
        $region24: #{tpu_custom_call.1} parent=19 // pred_fallthru
          _
      $region20: #{tpu_custom_call.1} parent=5 // pred_fallthru
        _
      %p201 = scmp.le.s32.totalorder 1, %s17
      %p202 = scmp.lt.s32.totalorder %s17, 3
      %p203 = pnand %p201, %p202
      %p204 = pneg %p203
      // Predicated region
      $region25: #{tpu_custom_call.1} parent=5 // pred_check
        _
      $region26: #{tpu_custom_call.1} parent=5 // pred_check_branch
        %206 = sbr.rel (%p203) target = $region28
      $region27: #{tpu_custom_call.1} parent=5 // pred_region
        %s207 = ssub.s32 %s17, 1
        %s208 = smul.u32 32, %s26
        %p209 = scmp.lt.s32.totalorder %s208, 63
        %s210 = scalar_select %p209, %s208, 63
        %s211 = smul.addr %s210, 2
        %s212 = smul.addr %s211, 4
        %s213 = scalar_lea.vmem %s0, %s212
        %p214 = pneg %p55
        %p215 = pneg %p52
        %p216 = scmp.lt.s32.totalorder %s27, 0
        %s217 = scalar_select %p216, %s27, 0
        %s218 = smul.addr %s217, 4
        %s219 = scalar_lea.vmem %s1, %s218
        %p220 = pneg %p81
        %p221 = pneg %p78
        %p222 = pneg %p109
        %p223 = pneg %p106
        %s224 = smul.u32 32, %s26
        %p225 = scmp.lt.s32.totalorder %s224, 63
        %s226 = scalar_select %p225, %s224, 63
        %p227 = scmp.lt.s32.totalorder %s27, 0
        %s228 = scalar_select %p227, %s27, 0
        %s229 = sadd.s32 %s228, %s226
        %s230 = smul.addr %s229, 4
        %s231 = scalar_lea.vmem %s2, %s230
        %p232 = pneg %p137
        %p233 = pneg %p134
        %s234 = sand.u32 %s124, 1
        %s235 = scalar_lea.sflag [#allocation3], %s234
        %s236 = sand.u32 %s124, 1
        %s237 = scalar_lea.vmem [#allocation2], %s236
        %p238 = pneg %p165
        %p239 = pneg %p162
        %s240 = sand.u32 %s152, 1
        %s241 = scalar_lea.sflag [#allocation5], %s240
        %s242 = sand.u32 %s152, 1
        %s243 = scalar_lea.vmem [#allocation4], %s242
        %s244 = smul.u32 32, %s26
        %p245 = scmp.lt.s32.totalorder %s244, 63
        %s246 = scalar_select %p245, %s244, 63
        %s247 = smul.addr %s246, 2
        %s248 = smul.addr %s247, 4
        %s249 = scalar_lea.vmem %s0, %s248
        %s250 = smul.u32 32, %s26
        %p251 = scmp.lt.s32.totalorder %s27, 0
        %s252 = scalar_select %p251, %s27, 0
        %s253 = smul.addr %s252, 4
        %s254 = scalar_lea.vmem %s1, %s253
        %s255 = smul.u32 32, %s26
        %p256 = scmp.lt.s32.totalorder %s255, 63
        %s257 = scalar_select %p256, %s255, 63
        %p258 = scmp.lt.s32.totalorder %s27, 0
        %s259 = scalar_select %p258, %s27, 0
        %s260 = sadd.s32 %s259, %s257
        %s261 = smul.addr %s260, 4
        %s262 = scalar_lea.vmem %s2, %s261
        %s263 = smul.u32 32, %s26
        %v265 = vld [vmem:[%s249] sm:$0xff]
        %v266 = vld [vmem:[%s249 + $0x8] sm:$0xff]
        %v267 = vld [vmem:[%s249 + $0x10] sm:$0xff]
        %v268 = vld [vmem:[%s249 + $0x18] sm:$0xff]
        %v269 = vld [vmem:[%s249 + $0x20] sm:$0xff]
        %v270 = vld [vmem:[%s249 + $0x28] sm:$0xff]
        %v271 = vld [vmem:[%s249 + $0x30] sm:$0xff]
        %v272 = vld [vmem:[%s249 + $0x38] sm:$0xff]
        %v273 = vld [vmem:[%s249 + $0x40] sm:$0xff]
        %v274 = vld [vmem:[%s249 + $0x48] sm:$0xff]
        %v275 = vld [vmem:[%s249 + $0x50] sm:$0xff]
        %v276 = vld [vmem:[%s249 + $0x58] sm:$0xff]
        %v277 = vld [vmem:[%s249 + $0x60] sm:$0xff]
        %v278 = vld [vmem:[%s249 + $0x68] sm:$0xff]
        %v279 = vld [vmem:[%s249 + $0x70] sm:$0xff]
        %v280 = vld [vmem:[%s249 + $0x78] sm:$0xff]
        %v281 = vld [vmem:[%s249 + $0x80] sm:$0xff]
        %v282 = vld [vmem:[%s249 + $0x88] sm:$0xff]
        %v283 = vld [vmem:[%s249 + $0x90] sm:$0xff]
        %v284 = vld [vmem:[%s249 + $0x98] sm:$0xff]
        %v285 = vld [vmem:[%s249 + $0xa0] sm:$0xff]
        %v286 = vld [vmem:[%s249 + $0xa8] sm:$0xff]
        %v287 = vld [vmem:[%s249 + $0xb0] sm:$0xff]
        %v288 = vld [vmem:[%s249 + $0xb8] sm:$0xff]
        %v289 = vld [vmem:[%s249 + $0xc0] sm:$0xff]
        %v290 = vld [vmem:[%s249 + $0xc8] sm:$0xff]
        %v291 = vld [vmem:[%s249 + $0xd0] sm:$0xff]
        %v292 = vld [vmem:[%s249 + $0xd8] sm:$0xff]
        %v293 = vld [vmem:[%s249 + $0xe0] sm:$0xff]
        %v294 = vld [vmem:[%s249 + $0xe8] sm:$0xff]
        %v295 = vld [vmem:[%s249 + $0xf0] sm:$0xff]
        %v296 = vld [vmem:[%s249 + $0xf8] sm:$0xff]
        %v297 = vld [vmem:[%s254] sm:$0xf]
        %v298 = vld [vmem:[%s254 + $0x4] sm:$0xf]
        %v299 = vld [vmem:[%s254 + $0x8] sm:$0xf]
        %v300 = vld [vmem:[%s254 + $0xc] sm:$0xf]
        %v301 = vld [vmem:[%s254 + $0x10] sm:$0xf]
        %v302 = vld [vmem:[%s254 + $0x14] sm:$0xf]
        %v303 = vld [vmem:[%s254 + $0x18] sm:$0xf]
        %v304 = vld [vmem:[%s254 + $0x1c] sm:$0xf]
        %v305 = vld [vmem:[%s254 + $0x20] sm:$0xf]
        %v306 = vld [vmem:[%s254 + $0x24] sm:$0xf]
        %v307 = vld [vmem:[%s254 + $0x28] sm:$0xf]
        %v308 = vld [vmem:[%s254 + $0x2c] sm:$0xf]
        %v309 = vld [vmem:[%s254 + $0x30] sm:$0xf]
        %v310 = vld [vmem:[%s254 + $0x34] sm:$0xf]
        %v311 = vld [vmem:[%s254 + $0x38] sm:$0xf]
        %v312 = vld [vmem:[%s254 + $0x3c] sm:$0xf]
        %v313 = vld [vmem:[%s254 + $0x40] sm:$0xf]
        %v314 = vld [vmem:[%s254 + $0x44] sm:$0xf]
        %v315 = vld [vmem:[%s254 + $0x48] sm:$0x3]
        %v348 = vunpack.c.l.b16 %v265
        %v349 = vunpack.c.h.b16 %v265
        %v350 = vunpack.c.l.b16 %v266
        %v351 = vunpack.c.h.b16 %v266
        %v352 = vunpack.c.l.b16 %v267
        %v353 = vunpack.c.h.b16 %v267
        %v354 = vunpack.c.l.b16 %v268
        %v355 = vunpack.c.h.b16 %v268
        %v356 = vunpack.c.l.b16 %v269
        %v357 = vunpack.c.h.b16 %v269
        %v358 = vunpack.c.l.b16 %v270
        %v359 = vunpack.c.h.b16 %v270
        %v360 = vunpack.c.l.b16 %v271
        %v361 = vunpack.c.h.b16 %v271
        %v362 = vunpack.c.l.b16 %v272
        %v363 = vunpack.c.h.b16 %v272
        %v364 = vunpack.c.l.b16 %v273
        %v365 = vunpack.c.h.b16 %v273
        %v366 = vunpack.c.l.b16 %v274
        %v367 = vunpack.c.h.b16 %v274
        %v368 = vunpack.c.l.b16 %v275
        %v369 = vunpack.c.h.b16 %v275
        %v370 = vunpack.c.l.b16 %v276
        %v371 = vunpack.c.h.b16 %v276
        %v372 = vunpack.c.l.b16 %v277
        %v373 = vunpack.c.h.b16 %v277
        %v374 = vunpack.c.l.b16 %v278
        %v375 = vunpack.c.h.b16 %v278
        %v376 = vunpack.c.l.b16 %v279
        %v377 = vunpack.c.h.b16 %v279
        %v378 = vunpack.c.l.b16 %v280
        %v379 = vunpack.c.h.b16 %v280
        %v380 = vunpack.c.l.b16 %v281
        %v381 = vunpack.c.h.b16 %v281
        %v382 = vunpack.c.l.b16 %v282
        %v383 = vunpack.c.h.b16 %v282
        %v384 = vunpack.c.l.b16 %v283
        %v385 = vunpack.c.h.b16 %v283
        %v386 = vunpack.c.l.b16 %v284
        %v387 = vunpack.c.h.b16 %v284
        %v388 = vunpack.c.l.b16 %v285
        %v389 = vunpack.c.h.b16 %v285
        %v390 = vunpack.c.l.b16 %v286
        %v391 = vunpack.c.h.b16 %v286
        %v392 = vunpack.c.l.b16 %v287
        %v393 = vunpack.c.h.b16 %v287
        %v394 = vunpack.c.l.b16 %v288
        %v395 = vunpack.c.h.b16 %v288
        %v396 = vunpack.c.l.b16 %v289
        %v397 = vunpack.c.h.b16 %v289
        %v398 = vunpack.c.l.b16 %v290
        %v399 = vunpack.c.h.b16 %v290
        %v400 = vunpack.c.l.b16 %v291
        %v401 = vunpack.c.h.b16 %v291
        %v402 = vunpack.c.l.b16 %v292
        %v403 = vunpack.c.h.b16 %v292
        %v404 = vunpack.c.l.b16 %v293
        %v405 = vunpack.c.h.b16 %v293
        %v406 = vunpack.c.l.b16 %v294
        %v407 = vunpack.c.h.b16 %v294
        %v408 = vunpack.c.l.b16 %v295
        %v409 = vunpack.c.h.b16 %v295
        %v410 = vunpack.c.l.b16 %v296
        %v411 = vunpack.c.h.b16 %v296
        %v412 = vpack.c.b16 %v350, %v348
        %v413 = vpack.c.b16 %v351, %v349
        %v414 = vpack.c.b16 %v354, %v352
        %v415 = vpack.c.b16 %v355, %v353
        %v416 = vpack.c.b16 %v358, %v356
        %v417 = vpack.c.b16 %v359, %v357
        %v418 = vpack.c.b16 %v362, %v360
        %v419 = vpack.c.b16 %v363, %v361
        %v420 = vpack.c.b16 %v366, %v364
        %v421 = vpack.c.b16 %v367, %v365
        %v422 = vpack.c.b16 %v370, %v368
        %v423 = vpack.c.b16 %v371, %v369
        %v424 = vpack.c.b16 %v374, %v372
        %v425 = vpack.c.b16 %v375, %v373
        %v426 = vpack.c.b16 %v378, %v376
        %v427 = vpack.c.b16 %v379, %v377
        %v428 = vpack.c.b16 %v382, %v380
        %v429 = vpack.c.b16 %v383, %v381
        %v430 = vpack.c.b16 %v386, %v384
        %v431 = vpack.c.b16 %v387, %v385
        %v432 = vpack.c.b16 %v390, %v388
        %v433 = vpack.c.b16 %v391, %v389
        %v434 = vpack.c.b16 %v394, %v392
        %v435 = vpack.c.b16 %v395, %v393
        %v436 = vpack.c.b16 %v398, %v396
        %v437 = vpack.c.b16 %v399, %v397
        %v438 = vpack.c.b16 %v402, %v400
        %v439 = vpack.c.b16 %v403, %v401
        %v440 = vpack.c.b16 %v406, %v404
        %v441 = vpack.c.b16 %v407, %v405
        %v442 = vpack.c.b16 %v410, %v408
        %v443 = vpack.c.b16 %v411, %v409
        %v479 = vunpack.c.l.b16 %v297
        %v480 = vunpack.c.l.b16 %v298
        %v481 = vunpack.c.l.b16 %v299
        %v482 = vunpack.c.l.b16 %v300
        %v483 = vunpack.c.l.b16 %v301
        %v484 = vunpack.c.l.b16 %v302
        %v485 = vunpack.c.l.b16 %v303
        %v486 = vunpack.c.l.b16 %v304
        %v487 = vunpack.c.l.b16 %v305
        %v488 = vunpack.c.l.b16 %v306
        %v489 = vunpack.c.l.b16 %v307
        %v490 = vunpack.c.l.b16 %v308
        %v491 = vunpack.c.l.b16 %v309
        %v492 = vunpack.c.l.b16 %v310
        %v493 = vunpack.c.l.b16 %v311
        %v494 = vunpack.c.l.b16 %v312
        %v495 = vunpack.c.l.b16 %v313
        %v496 = vunpack.c.l.b16 %v314
        %v497 = vunpack.c.l.b16 %v315
        %v498 = vpack.c.b16 %v480, %v479
        %v499 = vpack.c.b16 %v482, %v481
        %v500 = vpack.c.b16 %v484, %v483
        %v501 = vpack.c.b16 %v486, %v485
        %v502 = vpack.c.b16 %v488, %v487
        %v503 = vpack.c.b16 %v490, %v489
        %v504 = vpack.c.b16 %v492, %v491
        %v505 = vpack.c.b16 %v494, %v493
        %v506 = vpack.c.b16 %v496, %v495
        %v507 = vpack.c.b16 %v497, %v497
        %vm517 = vcmask 154624
        %v519 = vsel %vm517, %v413, 0
        %v522 = vsel %vm517, %v415, 0
        %v525 = vsel %vm517, %v417, 0
        %v528 = vsel %vm517, %v419, 0
        %v531 = vsel %vm517, %v421, 0
        %v534 = vsel %vm517, %v423, 0
        %v537 = vsel %vm517, %v425, 0
        %v540 = vsel %vm517, %v427, 0
        %v543 = vsel %vm517, %v429, 0
        %v546 = vsel %vm517, %v431, 0
        %v549 = vsel %vm517, %v433, 0
        %v552 = vsel %vm517, %v435, 0
        %v555 = vsel %vm517, %v437, 0
        %v558 = vsel %vm517, %v439, 0
        %v561 = vsel %vm517, %v441, 0
        %v564 = vsel %vm517, %v443, 0
        %vm566 = vcmask 1040384
        %vm567 = vcmask 1041408
        %v568 = vsel %vm566, 4294967295, 65535
        %v569 = vsel %vm567, %v568, 0
        %v571 = vand.u32 %v507, %v569
        %573 = vmatprep.subr.bf16.mxu0 0
        %574 = vmatpush1.bf16.msra.mxu0 %v498
        %575 = vmatprep.subr.bf16.mxu0 0
        %576 = vmatpush1.bf16.msra.mxu0 %v499
        %577 = vmatprep.subr.bf16.mxu0 0
        %578 = vmatpush1.bf16.msra.mxu0 %v500
        %579 = vmatprep.subr.bf16.mxu0 0
        %580 = vmatpush1.bf16.msra.mxu0 %v501
        %581 = vmatprep.subr.bf16.mxu0 0
        %582 = vmatpush1.bf16.msra.mxu0 %v502
        %583 = vmatprep.subr.bf16.mxu0 0
        %584 = vmatpush1.bf16.msra.mxu0 %v503
        %585 = vmatprep.subr.bf16.mxu0 0
        %586 = vmatpush1.bf16.msra.mxu0 %v504
        %587 = vmatprep.subr.bf16.mxu0 0
        %588 = vmatpush1.bf16.msra.mxu0 %v505
        %589 = vmatprep.subr.bf16.mxu0 0
        %590 = vmatpush1.bf16.msra.mxu0 %v506
        %591 = vmatprep.subr.bf16.mxu0 0
        %592 = vmatpush1.bf16.msra.mxu0 %v571
        %593 = vmatprep.subr.bf16.mxu0 0
        %594 = vmatpush1.bf16.msra.mxu0 0
        %595 = vmatprep.subr.bf16.mxu0 0
        %596 = vmatpush1.bf16.msra.mxu0 0
        %597 = vmatprep.subr.bf16.mxu0 0
        %598 = vmatpush1.bf16.msra.mxu0 0
        %599 = vmatprep.subr.bf16.mxu0 0
        %600 = vmatpush1.bf16.msra.mxu0 0
        %601 = vmatprep.subr.bf16.mxu0 0
        %602 = vmatpush1.bf16.msra.mxu0 0
        %603 = vmatprep.subr.bf16.mxu0 0
        %604 = vmatpush1.bf16.msra.mxu0 0
        %605 = vmatprep.mubr.bf16.mxu0 %v519
        %606 = vmatmul.mubr.bf16.gmra.mrb[0].mxu0 %v412
        %v607 = vpop.f32.mrb[0].mxu0
        %v608 = vadd.f32 0.0, %v607
        %v609 = vpop.f32.mrb[0].mxu0
        %v610 = vpop.f32.mrb[0].mxu0
        %v611 = vadd.f32 0.0, %v610
        %v612 = vpop.f32.mrb[0].mxu0
        %613 = vmatprep.mubr.bf16.mxu0 %v522
        %614 = vmatmul.mubr.bf16.gmra.mrb[0].mxu0 %v414
        %v615 = vpop.f32.mrb[0].mxu0
        %v616 = vadd.f32 0.0, %v615
        %v617 = vpop.f32.mrb[0].mxu0
        %v618 = vpop.f32.mrb[0].mxu0
        %v619 = vadd.f32 0.0, %v618
        %v620 = vpop.f32.mrb[0].mxu0
        %621 = vmatprep.mubr.bf16.mxu0 %v525
        %622 = vmatmul.mubr.bf16.gmra.mrb[0].mxu0 %v416
        %v623 = vpop.f32.mrb[0].mxu0
        %v624 = vadd.f32 0.0, %v623
        %v625 = vpop.f32.mrb[0].mxu0
        %v626 = vpop.f32.mrb[0].mxu0
        %v627 = vadd.f32 0.0, %v626
        %v628 = vpop.f32.mrb[0].mxu0
        %629 = vmatprep.mubr.bf16.mxu0 %v528
        %630 = vmatmul.mubr.bf16.gmra.mrb[0].mxu0 %v418
        %v631 = vpop.f32.mrb[0].mxu0
        %v632 = vadd.f32 0.0, %v631
        %v633 = vpop.f32.mrb[0].mxu0
        %v634 = vpop.f32.mrb[0].mxu0
        %v635 = vadd.f32 0.0, %v634
        %v636 = vpop.f32.mrb[0].mxu0
        %637 = vmatprep.mubr.bf16.mxu0 %v531
        %638 = vmatmul.mubr.bf16.gmra.mrb[0].mxu0 %v420
        %v639 = vpop.f32.mrb[0].mxu0
        %v640 = vadd.f32 0.0, %v639
        %v641 = vpop.f32.mrb[0].mxu0
        %v642 = vpop.f32.mrb[0].mxu0
        %v643 = vadd.f32 0.0, %v642
        %v644 = vpop.f32.mrb[0].mxu0
        %645 = vmatprep.mubr.bf16.mxu0 %v534
        %646 = vmatmul.mubr.bf16.gmra.mrb[0].mxu0 %v422
        %v647 = vpop.f32.mrb[0].mxu0
        %v648 = vadd.f32 0.0, %v647
        %v649 = vpop.f32.mrb[0].mxu0
        %v650 = vpop.f32.mrb[0].mxu0
        %v651 = vadd.f32 0.0, %v650
        %v652 = vpop.f32.mrb[0].mxu0
        %653 = vmatprep.mubr.bf16.mxu0 %v537
        %654 = vmatmul.mubr.bf16.gmra.mrb[0].mxu0 %v424
        %v655 = vpop.f32.mrb[0].mxu0
        %v656 = vadd.f32 0.0, %v655
        %v657 = vpop.f32.mrb[0].mxu0
        %v658 = vpop.f32.mrb[0].mxu0
        %v659 = vadd.f32 0.0, %v658
        %v660 = vpop.f32.mrb[0].mxu0
        %661 = vmatprep.mubr.bf16.mxu0 %v540
        %662 = vmatmul.mubr.bf16.gmra.mrb[0].mxu0 %v426
        %v663 = vpop.f32.mrb[0].mxu0
        %v664 = vadd.f32 0.0, %v663
        %v665 = vpop.f32.mrb[0].mxu0
        %v666 = vpop.f32.mrb[0].mxu0
        %v667 = vadd.f32 0.0, %v666
        %v668 = vpop.f32.mrb[0].mxu0
        %669 = vmatprep.mubr.bf16.mxu0 %v543
        %670 = vmatmul.mubr.bf16.gmra.mrb[0].mxu0 %v428
        %v671 = vpop.f32.mrb[0].mxu0
        %v672 = vadd.f32 0.0, %v671
        %v673 = vpop.f32.mrb[0].mxu0
        %v674 = vpop.f32.mrb[0].mxu0
        %v675 = vadd.f32 0.0, %v674
        %v676 = vpop.f32.mrb[0].mxu0
        %677 = vmatprep.mubr.bf16.mxu0 %v546
        %678 = vmatmul.mubr.bf16.gmra.mrb[0].mxu0 %v430
        %v679 = vpop.f32.mrb[0].mxu0
        %v680 = vadd.f32 0.0, %v679
        %v681 = vpop.f32.mrb[0].mxu0
        %v682 = vpop.f32.mrb[0].mxu0
        %v683 = vadd.f32 0.0, %v682
        %v684 = vpop.f32.mrb[0].mxu0
        %685 = vmatprep.mubr.bf16.mxu0 %v549
        %686 = vmatmul.mubr.bf16.gmra.mrb[0].mxu0 %v432
        %v687 = vpop.f32.mrb[0].mxu0
        %v688 = vadd.f32 0.0, %v687
        %v689 = vpop.f32.mrb[0].mxu0
        %v690 = vpop.f32.mrb[0].mxu0
        %v691 = vadd.f32 0.0, %v690
        %v692 = vpop.f32.mrb[0].mxu0
        %693 = vmatprep.mubr.bf16.mxu0 %v552
        %694 = vmatmul.mubr.bf16.gmra.mrb[0].mxu0 %v434
        %v695 = vpop.f32.mrb[0].mxu0
        %v696 = vadd.f32 0.0, %v695
        %v697 = vpop.f32.mrb[0].mxu0
        %v698 = vpop.f32.mrb[0].mxu0
        %v699 = vadd.f32 0.0, %v698
        %v700 = vpop.f32.mrb[0].mxu0
        %701 = vmatprep.mubr.bf16.mxu0 %v555
        %702 = vmatmul.mubr.bf16.gmra.mrb[0].mxu0 %v436
        %v703 = vpop.f32.mrb[0].mxu0
        %v704 = vadd.f32 0.0, %v703
        %v705 = vpop.f32.mrb[0].mxu0
        %v706 = vpop.f32.mrb[0].mxu0
        %v707 = vadd.f32 0.0, %v706
        %v708 = vpop.f32.mrb[0].mxu0
        %709 = vmatprep.mubr.bf16.mxu0 %v558
        %710 = vmatmul.mubr.bf16.gmra.mrb[0].mxu0 %v438
        %v711 = vpop.f32.mrb[0].mxu0
        %v712 = vadd.f32 0.0, %v711
        %v713 = vpop.f32.mrb[0].mxu0
        %v714 = vpop.f32.mrb[0].mxu0
        %v715 = vadd.f32 0.0, %v714
        %v716 = vpop.f32.mrb[0].mxu0
        %717 = vmatprep.mubr.bf16.mxu0 %v561
        %718 = vmatmul.mubr.bf16.gmra.mrb[0].mxu0 %v440
        %v719 = vpop.f32.mrb[0].mxu0
        %v720 = vadd.f32 0.0, %v719
        %v721 = vpop.f32.mrb[0].mxu0
        %v722 = vpop.f32.mrb[0].mxu0
        %v723 = vadd.f32 0.0, %v722
        %v724 = vpop.f32.mrb[0].mxu0
        %725 = vmatprep.mubr.bf16.mxu0 %v564
        %726 = vmatmul.mubr.bf16.gmra.mrb[0].mxu0 %v442
        %v727 = vpop.f32.mrb[0].mxu0
        %v728 = vadd.f32 0.0, %v727
        %v729 = vpop.f32.mrb[0].mxu0
        %v730 = vpop.f32.mrb[0].mxu0
        %v731 = vadd.f32 0.0, %v730
        %v732 = vpop.f32.mrb[0].mxu0
        %733 = vdwg.mxu0
        %vm734 = vcmask 523264
        %v735 = vsel %vm734, %v608, 0.0
        %v736 = vsel %vm734, %v611, 0.0
        %v737 = vadd.f32 %v735, %v736
        %v738 = vsel %vm734, %v616, 0.0
        %v739 = vadd.f32 %v737, %v738
        %v740 = vsel %vm734, %v619, 0.0
        %v741 = vadd.f32 %v739, %v740
        %v742 = vsel %vm734, %v624, 0.0
        %v743 = vadd.f32 %v741, %v742
        %v744 = vsel %vm734, %v627, 0.0
        %v745 = vadd.f32 %v743, %v744
        %v746 = vsel %vm734, %v632, 0.0
        %v747 = vadd.f32 %v745, %v746
        %v748 = vsel %vm734, %v635, 0.0
        %v749 = vadd.f32 %v747, %v748
        %v750 = vsel %vm734, %v640, 0.0
        %v751 = vadd.f32 %v749, %v750
        %v752 = vsel %vm734, %v643, 0.0
        %v753 = vadd.f32 %v751, %v752
        %v754 = vsel %vm734, %v648, 0.0
        %v755 = vadd.f32 %v753, %v754
        %v756 = vsel %vm734, %v651, 0.0
        %v757 = vadd.f32 %v755, %v756
        %v758 = vsel %vm734, %v656, 0.0
        %v759 = vadd.f32 %v757, %v758
        %v760 = vsel %vm734, %v659, 0.0
        %v761 = vadd.f32 %v759, %v760
        %v762 = vsel %vm734, %v664, 0.0
        %v763 = vadd.f32 %v761, %v762
        %v764 = vsel %vm734, %v667, 0.0
        %v765 = vadd.f32 %v763, %v764
        %v766 = vsel %vm734, %v672, 0.0
        %v767 = vadd.f32 %v765, %v766
        %v768 = vsel %vm734, %v675, 0.0
        %v769 = vadd.f32 %v767, %v768
        %v770 = vsel %vm734, %v680, 0.0
        %v771 = vadd.f32 %v769, %v770
        %v772 = vsel %vm734, %v683, 0.0
        %v773 = vadd.f32 %v771, %v772
        %v774 = vsel %vm734, %v688, 0.0
        %v775 = vadd.f32 %v773, %v774
        %v776 = vsel %vm734, %v691, 0.0
        %v777 = vadd.f32 %v775, %v776
        %v778 = vsel %vm734, %v696, 0.0
        %v779 = vadd.f32 %v777, %v778
        %v780 = vsel %vm734, %v699, 0.0
        %v781 = vadd.f32 %v779, %v780
        %v782 = vsel %vm734, %v704, 0.0
        %v783 = vadd.f32 %v781, %v782
        %v784 = vsel %vm734, %v707, 0.0
        %v785 = vadd.f32 %v783, %v784
        %v786 = vsel %vm734, %v712, 0.0
        %v787 = vadd.f32 %v785, %v786
        %v788 = vsel %vm734, %v715, 0.0
        %v789 = vadd.f32 %v787, %v788
        %v790 = vsel %vm734, %v720, 0.0
        %v791 = vadd.f32 %v789, %v790
        %v792 = vsel %vm734, %v723, 0.0
        %v793 = vadd.f32 %v791, %v792
        %v794 = vsel %vm734, %v728, 0.0
        %v795 = vadd.f32 %v793, %v794
        %v796 = vsel %vm734, %v731, 0.0
        %v797 = vadd.f32 %v795, %v796
        %v798 = vrot.slane %v797, 4
        %v799 = vadd.f32 %v797, %v798
        %v800 = vrot.slane %v799, 2
        %v801 = vadd.f32 %v799, %v800
        %v802 = vrot.slane %v801, 1
        %v803 = vadd.f32 %v801, %v802
        %vm804 = vcmask 516096
        %805 = vst.msk [vmem:[%s237] sm:$0x1] %vm804, %v803
        %v806 = vmul.f32 %v608, %v608
        %v807 = vmul.f32 %v611, %v611
        %v808 = vmul.f32 %v616, %v616
        %v809 = vmul.f32 %v619, %v619
        %v810 = vmul.f32 %v624, %v624
        %v811 = vmul.f32 %v627, %v627
        %v812 = vmul.f32 %v632, %v632
        %v813 = vmul.f32 %v635, %v635
        %v814 = vmul.f32 %v640, %v640
        %v815 = vmul.f32 %v643, %v643
        %v816 = vmul.f32 %v648, %v648
        %v817 = vmul.f32 %v651, %v651
        %v818 = vmul.f32 %v656, %v656
        %v819 = vmul.f32 %v659, %v659
        %v820 = vmul.f32 %v664, %v664
        %v821 = vmul.f32 %v667, %v667
        %v822 = vmul.f32 %v672, %v672
        %v823 = vmul.f32 %v675, %v675
        %v824 = vmul.f32 %v680, %v680
        %v825 = vmul.f32 %v683, %v683
        %v826 = vmul.f32 %v688, %v688
        %v827 = vmul.f32 %v691, %v691
        %v828 = vmul.f32 %v696, %v696
        %v829 = vmul.f32 %v699, %v699
        %v830 = vmul.f32 %v704, %v704
        %v831 = vmul.f32 %v707, %v707
        %v832 = vmul.f32 %v712, %v712
        %v833 = vmul.f32 %v715, %v715
        %v834 = vmul.f32 %v720, %v720
        %v835 = vmul.f32 %v723, %v723
        %v836 = vmul.f32 %v728, %v728
        %v837 = vmul.f32 %v731, %v731
        %v838 = vsel %vm734, %v806, 0.0
        %v839 = vsel %vm734, %v807, 0.0
        %v840 = vadd.f32 %v838, %v839
        %v841 = vsel %vm734, %v808, 0.0
        %v842 = vadd.f32 %v840, %v841
        %v843 = vsel %vm734, %v809, 0.0
        %v844 = vadd.f32 %v842, %v843
        %v845 = vsel %vm734, %v810, 0.0
        %v846 = vadd.f32 %v844, %v845
        %v847 = vsel %vm734, %v811, 0.0
        %v848 = vadd.f32 %v846, %v847
        %v849 = vsel %vm734, %v812, 0.0
        %v850 = vadd.f32 %v848, %v849
        %v851 = vsel %vm734, %v813, 0.0
        %v852 = vadd.f32 %v850, %v851
        %v853 = vsel %vm734, %v814, 0.0
        %v854 = vadd.f32 %v852, %v853
        %v855 = vsel %vm734, %v815, 0.0
        %v856 = vadd.f32 %v854, %v855
        %v857 = vsel %vm734, %v816, 0.0
        %v858 = vadd.f32 %v856, %v857
        %v859 = vsel %vm734, %v817, 0.0
        %v860 = vadd.f32 %v858, %v859
        %v861 = vsel %vm734, %v818, 0.0
        %v862 = vadd.f32 %v860, %v861
        %v863 = vsel %vm734, %v819, 0.0
        %v864 = vadd.f32 %v862, %v863
        %v865 = vsel %vm734, %v820, 0.0
        %v866 = vadd.f32 %v864, %v865
        %v867 = vsel %vm734, %v821, 0.0
        %v868 = vadd.f32 %v866, %v867
        %v869 = vsel %vm734, %v822, 0.0
        %v870 = vadd.f32 %v868, %v869
        %v871 = vsel %vm734, %v823, 0.0
        %v872 = vadd.f32 %v870, %v871
        %v873 = vsel %vm734, %v824, 0.0
        %v874 = vadd.f32 %v872, %v873
        %v875 = vsel %vm734, %v825, 0.0
        %v876 = vadd.f32 %v874, %v875
        %v877 = vsel %vm734, %v826, 0.0
        %v878 = vadd.f32 %v876, %v877
        %v879 = vsel %vm734, %v827, 0.0
        %v880 = vadd.f32 %v878, %v879
        %v881 = vsel %vm734, %v828, 0.0
        %v882 = vadd.f32 %v880, %v881
        %v883 = vsel %vm734, %v829, 0.0
        %v884 = vadd.f32 %v882, %v883
        %v885 = vsel %vm734, %v830, 0.0
        %v886 = vadd.f32 %v884, %v885
        %v887 = vsel %vm734, %v831, 0.0
        %v888 = vadd.f32 %v886, %v887
        %v889 = vsel %vm734, %v832, 0.0
        %v890 = vadd.f32 %v888, %v889
        %v891 = vsel %vm734, %v833, 0.0
        %v892 = vadd.f32 %v890, %v891
        %v893 = vsel %vm734, %v834, 0.0
        %v894 = vadd.f32 %v892, %v893
        %v895 = vsel %vm734, %v835, 0.0
        %v896 = vadd.f32 %v894, %v895
        %v897 = vsel %vm734, %v836, 0.0
        %v898 = vadd.f32 %v896, %v897
        %v899 = vsel %vm734, %v837, 0.0
        %v900 = vadd.f32 %v898, %v899
        %v901 = vrot.slane %v900, 4
        %v902 = vadd.f32 %v900, %v901
        %v903 = vrot.slane %v902, 2
        %v904 = vadd.f32 %v902, %v903
        %v905 = vrot.slane %v904, 1
        %v906 = vadd.f32 %v904, %v905
        %907 = vst.msk [vmem:[%s243] sm:$0x1] %vm804, %v906
        %v908 = vpack.c.bf16 %v611, %v608
        %v909 = vpack.c.bf16 %v619, %v616
        %v910 = vpack.c.bf16 %v627, %v624
        %v911 = vpack.c.bf16 %v635, %v632
        %v912 = vpack.c.bf16 %v643, %v640
        %v913 = vpack.c.bf16 %v651, %v648
        %v914 = vpack.c.bf16 %v659, %v656
        %v915 = vpack.c.bf16 %v667, %v664
        %v916 = vpack.c.bf16 %v675, %v672
        %v917 = vpack.c.bf16 %v683, %v680
        %v918 = vpack.c.bf16 %v691, %v688
        %v919 = vpack.c.bf16 %v699, %v696
        %v920 = vpack.c.bf16 %v707, %v704
        %v921 = vpack.c.bf16 %v715, %v712
        %v922 = vpack.c.bf16 %v723, %v720
        %v923 = vpack.c.bf16 %v731, %v728
        %v940 = vunpack.c.l.b16 %v908
        %v941 = vunpack.c.h.b16 %v908
        %v942 = vunpack.c.l.b16 %v909
        %v943 = vunpack.c.h.b16 %v909
        %v944 = vunpack.c.l.b16 %v910
        %v945 = vunpack.c.h.b16 %v910
        %v946 = vunpack.c.l.b16 %v911
        %v947 = vunpack.c.h.b16 %v911
        %v948 = vunpack.c.l.b16 %v912
        %v949 = vunpack.c.h.b16 %v912
        %v950 = vunpack.c.l.b16 %v913
        %v951 = vunpack.c.h.b16 %v913
        %v952 = vunpack.c.l.b16 %v914
        %v953 = vunpack.c.h.b16 %v914
        %v954 = vunpack.c.l.b16 %v915
        %v955 = vunpack.c.h.b16 %v915
        %v956 = vunpack.c.l.b16 %v916
        %v957 = vunpack.c.h.b16 %v916
        %v958 = vunpack.c.l.b16 %v917
        %v959 = vunpack.c.h.b16 %v917
        %v960 = vunpack.c.l.b16 %v918
        %v961 = vunpack.c.h.b16 %v918
        %v962 = vunpack.c.l.b16 %v919
        %v963 = vunpack.c.h.b16 %v919
        %v964 = vunpack.c.l.b16 %v920
        %v965 = vunpack.c.h.b16 %v920
        %v966 = vunpack.c.l.b16 %v921
        %v967 = vunpack.c.h.b16 %v921
        %v968 = vunpack.c.l.b16 %v922
        %v969 = vunpack.c.h.b16 %v922
        %v970 = vunpack.c.l.b16 %v923
        %v971 = vunpack.c.h.b16 %v923
        %v972 = vpack.c.b16 %v940, %v940
        %v973 = vpack.c.b16 %v941, %v941
        %v974 = vpack.c.b16 %v942, %v942
        %v975 = vpack.c.b16 %v943, %v943
        %v976 = vpack.c.b16 %v944, %v944
        %v977 = vpack.c.b16 %v945, %v945
        %v978 = vpack.c.b16 %v946, %v946
        %v979 = vpack.c.b16 %v947, %v947
        %v980 = vpack.c.b16 %v948, %v948
        %v981 = vpack.c.b16 %v949, %v949
        %v982 = vpack.c.b16 %v950, %v950
        %v983 = vpack.c.b16 %v951, %v951
        %v984 = vpack.c.b16 %v952, %v952
        %v985 = vpack.c.b16 %v953, %v953
        %v986 = vpack.c.b16 %v954, %v954
        %v987 = vpack.c.b16 %v955, %v955
        %v988 = vpack.c.b16 %v956, %v956
        %v989 = vpack.c.b16 %v957, %v957
        %v990 = vpack.c.b16 %v958, %v958
        %v991 = vpack.c.b16 %v959, %v959
        %v992 = vpack.c.b16 %v960, %v960
        %v993 = vpack.c.b16 %v961, %v961
        %v994 = vpack.c.b16 %v962, %v962
        %v995 = vpack.c.b16 %v963, %v963
        %v996 = vpack.c.b16 %v964, %v964
        %v997 = vpack.c.b16 %v965, %v965
        %v998 = vpack.c.b16 %v966, %v966
        %v999 = vpack.c.b16 %v967, %v967
        %v1000 = vpack.c.b16 %v968, %v968
        %v1001 = vpack.c.b16 %v969, %v969
        %v1002 = vpack.c.b16 %v970, %v970
        %v1003 = vpack.c.b16 %v971, %v971
        %vm1036 = vcmask 519168
        %1037 = vst.msk [vmem:[%s262] sm:$0xf] %vm1036, %v972
        %1038 = vst.msk [vmem:[%s262 + $0x4] sm:$0xf] %vm1036, %v973
        %1039 = vst.msk [vmem:[%s262 + $0x8] sm:$0xf] %vm1036, %v974
        %1040 = vst.msk [vmem:[%s262 + $0xc] sm:$0xf] %vm1036, %v975
        %1041 = vst.msk [vmem:[%s262 + $0x10] sm:$0xf] %vm1036, %v976
        %1042 = vst.msk [vmem:[%s262 + $0x14] sm:$0xf] %vm1036, %v977
        %1043 = vst.msk [vmem:[%s262 + $0x18] sm:$0xf] %vm1036, %v978
        %1044 = vst.msk [vmem:[%s262 + $0x1c] sm:$0xf] %vm1036, %v979
        %1045 = vst.msk [vmem:[%s262 + $0x20] sm:$0xf] %vm1036, %v980
        %1046 = vst.msk [vmem:[%s262 + $0x24] sm:$0xf] %vm1036, %v981
        %1047 = vst.msk [vmem:[%s262 + $0x28] sm:$0xf] %vm1036, %v982
        %1048 = vst.msk [vmem:[%s262 + $0x2c] sm:$0xf] %vm1036, %v983
        %1049 = vst.msk [vmem:[%s262 + $0x30] sm:$0xf] %vm1036, %v984
        %1050 = vst.msk [vmem:[%s262 + $0x34] sm:$0xf] %vm1036, %v985
        %1051 = vst.msk [vmem:[%s262 + $0x38] sm:$0xf] %vm1036, %v986
        %1052 = vst.msk [vmem:[%s262 + $0x3c] sm:$0xf] %vm1036, %v987
        %1053 = vst.msk [vmem:[%s262 + $0x40] sm:$0xf] %vm1036, %v988
        %1054 = vst.msk [vmem:[%s262 + $0x44] sm:$0xf] %vm1036, %v989
        %1055 = vst.msk [vmem:[%s262 + $0x48] sm:$0xf] %vm1036, %v990
        %1056 = vst.msk [vmem:[%s262 + $0x4c] sm:$0xf] %vm1036, %v991
        %1057 = vst.msk [vmem:[%s262 + $0x50] sm:$0xf] %vm1036, %v992
        %1058 = vst.msk [vmem:[%s262 + $0x54] sm:$0xf] %vm1036, %v993
        %1059 = vst.msk [vmem:[%s262 + $0x58] sm:$0xf] %vm1036, %v994
        %1060 = vst.msk [vmem:[%s262 + $0x5c] sm:$0xf] %vm1036, %v995
        %1061 = vst.msk [vmem:[%s262 + $0x60] sm:$0xf] %vm1036, %v996
        %1062 = vst.msk [vmem:[%s262 + $0x64] sm:$0xf] %vm1036, %v997
        %1063 = vst.msk [vmem:[%s262 + $0x68] sm:$0xf] %vm1036, %v998
        %1064 = vst.msk [vmem:[%s262 + $0x6c] sm:$0xf] %vm1036, %v999
        %1065 = vst.msk [vmem:[%s262 + $0x70] sm:$0xf] %vm1036, %v1000
        %1066 = vst.msk [vmem:[%s262 + $0x74] sm:$0xf] %vm1036, %v1001
        %1067 = vst.msk [vmem:[%s262 + $0x78] sm:$0xf] %vm1036, %v1002
        %1068 = vst.msk [vmem:[%s262 + $0x7c] sm:$0xf] %vm1036, %v1003
        %s1069 = smul.u32 32, %s26
        %p1070 = scmp.lt.s32.totalorder %s1069, 63
        %s1071 = scalar_select %p1070, %s1069, 63
        %p1072 = scmp.lt.s32.totalorder %s27, 0
        %s1073 = scalar_select %p1072, %s27, 0
        %s1074 = sadd.s32 %s1073, %s1071
        %s1075 = smul.addr %s1074, 4
        %s1076 = scalar_lea.vmem %s2, %s1075
        %s1077 = sand.u32 %s124, 1
        %s1078 = scalar_lea.sflag [#allocation3], %s1077
        %s1079 = sand.u32 %s124, 1
        %s1080 = scalar_lea.vmem [#allocation2], %s1079
        %s1081 = sand.u32 %s152, 1
        %s1082 = scalar_lea.sflag [#allocation5], %s1081
        %s1083 = sand.u32 %s152, 1
        %s1084 = scalar_lea.vmem [#allocation4], %s1083
        // Predicated region
        $region29: #{tpu_custom_call.1} parent=27 // pred_check
          %p1085 = pneg %p106
        $region30: #{tpu_custom_call.1} parent=27 // pred_check_branch
          %1087 = sbr.rel (%p1085) target = $region32
        $region31: #{tpu_custom_call.1} parent=27 // pred_region
          %s1088 = smul.u32 32, %s26
        $region32: #{tpu_custom_call.1} parent=27 // pred_fallthru
          _
        // Predicated region
        $region33: #{tpu_custom_call.1} parent=27 // pred_check
          %p1089 = pneg %p134
        $region34: #{tpu_custom_call.1} parent=27 // pred_check_branch
          %1091 = sbr.rel (%p1089) target = $region36
        $region35: #{tpu_custom_call.1} parent=27 // pred_region
          %s1093 = ssub.s32 16, 16
          %1094 = vsyncadd %s1078, %s1093
          %s1095 = sadd.s32 %s27, %s26
          %s1096 = smul.addr %s1095, 16
          %s1097 = scalar_lea.hbm %s3, %s1096
          %s1099 = sshll.u32 %s1080, 4
          %s1100 = int_to_ptr.vmem [resolvable:$true] %s1099
          %1102 = dma.vmem_to_hbm [thread:$0]  %s1100, 16, %s1097, %s1078
        $region36: #{tpu_custom_call.1} parent=27 // pred_fallthru
          _
        // Predicated region
        $region37: #{tpu_custom_call.1} parent=27 // pred_check
          %p1103 = pneg %p162
        $region38: #{tpu_custom_call.1} parent=27 // pred_check_branch
          %1105 = sbr.rel (%p1103) target = $region40
        $region39: #{tpu_custom_call.1} parent=27 // pred_region
          %s1107 = ssub.s32 16, 16
          %1108 = vsyncadd %s1082, %s1107
          %s1109 = sadd.s32 %s27, %s26
          %s1110 = smul.addr %s1109, 16
          %s1111 = scalar_lea.hbm %s4, %s1110
          %s1113 = sshll.u32 %s1084, 4
          %s1114 = int_to_ptr.vmem [resolvable:$true] %s1113
          %1116 = dma.vmem_to_hbm [thread:$0]  %s1114, 16, %s1111, %s1082
        $region40: #{tpu_custom_call.1} parent=27 // pred_fallthru
          _
      $region28: #{tpu_custom_call.1} parent=5 // pred_fallthru
        _
      %p1117 = scmp.le.s32.totalorder 2, %s17
      // Predicated region
      $region41: #{tpu_custom_call.1} parent=5 // pred_check
        %p1118 = pneg %p1117
      $region42: #{tpu_custom_call.1} parent=5 // pred_check_branch
        %1120 = sbr.rel (%p1118) target = $region44
      $region43: #{tpu_custom_call.1} parent=5 // pred_region
        %s1121 = ssub.s32 %s17, 2
        // Predicated region
        $region45: #{tpu_custom_call.1} parent=43 // pred_check
          %p1122 = pneg %p112
        $region46: #{tpu_custom_call.1} parent=43 // pred_check_branch
          %1124 = sbr.rel (%p1122) target = $region48
        $region47: #{tpu_custom_call.1} parent=43 // pred_region
          %s1125 = smul.u32 32, %s28
          %p1126 = scmp.lt.s32.totalorder %s1125, 63
          %s1127 = scalar_select %p1126, %s1125, 63
          %p1128 = scmp.lt.s32.totalorder %s29, 0
          %s1129 = scalar_select %p1128, %s29, 0
          %s1130 = sadd.s32 %s1129, %s1127
          %s1131 = smul.addr %s1130, 4
          %s1132 = scalar_lea.vmem %s2, %s1131
        $region48: #{tpu_custom_call.1} parent=43 // pred_fallthru
          _
        // Predicated region
        $region49: #{tpu_custom_call.1} parent=43 // pred_check
          %p1133 = pneg %p140
        $region50: #{tpu_custom_call.1} parent=43 // pred_check_branch
          %1135 = sbr.rel (%p1133) target = $region52
        $region51: #{tpu_custom_call.1} parent=43 // pred_region
          %s1136 = sand.u32 %s125, 1
          %s1137 = scalar_lea.sflag [#allocation3], %s1136
          %s1138 = sand.u32 %s125, 1
          %s1139 = scalar_lea.vmem [#allocation2], %s1138
          %1140 = dma.done %s1137, 16
        $region52: #{tpu_custom_call.1} parent=43 // pred_fallthru
          _
        // Predicated region
        $region53: #{tpu_custom_call.1} parent=43 // pred_check
          %p1141 = pneg %p168
        $region54: #{tpu_custom_call.1} parent=43 // pred_check_branch
          %1143 = sbr.rel (%p1141) target = $region56
        $region55: #{tpu_custom_call.1} parent=43 // pred_region
          %s1144 = sand.u32 %s153, 1
          %s1145 = scalar_lea.sflag [#allocation5], %s1144
          %s1146 = sand.u32 %s153, 1
          %s1147 = scalar_lea.vmem [#allocation4], %s1146
          %1148 = dma.done %s1145, 16
        $region56: #{tpu_custom_call.1} parent=43 // pred_fallthru
          _
      $region44: #{tpu_custom_call.1} parent=5 // pred_fallthru
        _
    $region6: #{tpu_custom_call.1} parent=1 // loop_footer
      %s21 = sadd.s32 1, %s17
    $region7: #{tpu_custom_call.1} parent=1 // loop_footer_branch
      %16 = sbr.rel target = $region3
    $region8: #{tpu_custom_call.1} parent=1 // loop_exit
      _
    %1149 = vsyncpa [#allocation3], 1
    %s1150 = scalar_lea.sflag [#allocation3], 1
    %1151 = vsyncpa %s1150, 1
    %1152 = vsyncpa [#allocation5], 1
    %s1153 = scalar_lea.sflag [#allocation5], 1
    %1154 = vsyncpa %s1153, 1

</llo_original>
